<compile_context>
chip_gen: v5e
topology: v5e:2x2
jax: 0.10.0
libtpu: 0.0.40
codegen_flags: <defaults>
</compile_context>

<pallas_src>
import functools

import jax
import jax.numpy as jnp
from jax.experimental import pallas as pl
from jax.experimental.pallas import tpu as pltpu


def _round_up(x, m):
    return -(-x // m) * m


def _tpu_budgets():
    """Generation-aware (vmem_limit_bytes, tile_budget_bytes, n_tensorcores)."""
    try:
        kind = jax.devices()[0].device_kind.lower()
    except Exception:  # pragma: no cover - defensive
        kind = ""
    mib = 1024 * 1024
    if "v7" in kind or "7x" in kind:
        return 48 * mib, 20 * mib, 2       # 64 MiB physical VMEM, 2 TCs/chip
    if "v6" in kind or "v5" in kind:
        return 96 * mib, 40 * mib, 1       # 128 MiB VMEM, 1 TC
    if "v4" in kind:
        return 64 * mib, 28 * mib, 2       # megacore: 2 TCs share the chip
    return None, 8 * mib, 1                # unknown: keep the default limit


def _pick_tile_n(n, c, itemsize, budget_bytes):
    """Largest row tile whose double-buffered wire input plus ~6 live f32
    (tile_n, c_pad) temporaries fit inside `budget_bytes` (capped at 8192)."""
    c_pad = max(128, _round_up(c, 128))
    per_row = 2 * c_pad * itemsize + 6 * 4 * c_pad
    tile = budget_bytes // per_row
    tile = max(8, min(8192, (tile // 8) * 8))
    return min(tile, _round_up(n, 8))


def _mosaic_params(semantics, vmem_limit):
    if vmem_limit is None:
        return pltpu.CompilerParams(dimension_semantics=semantics)
    return pltpu.CompilerParams(dimension_semantics=semantics,
                                vmem_limit_bytes=vmem_limit)


# --------------------------------------------------------------------------
# Shared in-kernel math
# --------------------------------------------------------------------------
def _tile_partials(y_raw, yt, valid):
    """Per-tile (4, C) partial: rows = [pcnt, rcnt, right, S]."""
    tn, num_c = y_raw.shape
    class_row = jax.lax.broadcasted_iota(jnp.int32, (1, num_c), 1)   # (1, C)

    # argmax on the wire dtype (exact; bf16 compares stay 2-wide packed on
    # v6e/v7x).  First-max semantics like torch.max(...).indices.
    m_raw = jnp.max(y_raw, axis=-1, keepdims=True)                   # (tn, 1)
    y_pred = jnp.min(
        jnp.where(y_raw == m_raw, class_row, jnp.int32(num_c)),
        axis=-1, keepdims=True)                                      # (tn, 1)

    # log-softmax in f32 (upcast after the load, not in the wrapper).
    y = y_raw.astype(jnp.float32)
    if valid is not None:
        y = jnp.where(valid, y, 0.0)          # keep padded rows finite
        m = jnp.max(y, axis=-1, keepdims=True)
    else:
        m = m_raw.astype(jnp.float32)
    shifted = y - m
    lse = jnp.log(jnp.sum(jnp.exp(shifted), axis=-1, keepdims=True))
    y_log = shifted - lse                                            # (tn, C)

    if valid is not None:
        validf = valid.astype(jnp.float32)                           # (tn, 1)
        pred_oh = jnp.where(class_row == y_pred, validf, 0.0)
        true_oh = jnp.where(class_row == yt, validf, 0.0)
    else:
        pred_oh = (class_row == y_pred).astype(jnp.float32)
        true_oh = (class_row == yt).astype(jnp.float32)

    # Column sums of exact 0/1 one-hots ride the (otherwise idle) MXU; an
    # (8, tn) ones LHS keeps the matmul natively tileable, row 0 is the sum.
    ones_lhs = jnp.ones((8, tn), jnp.float32)
    pcnt = jnp.dot(ones_lhs, pred_oh, preferred_element_type=jnp.float32)[0:1]
    rcnt = jnp.dot(ones_lhs, true_oh, preferred_element_type=jnp.float32)[0:1]
    right = jnp.dot(ones_lhs, pred_oh * true_oh,
                    preferred_element_type=jnp.float32)[0:1]
    # S stays on the VPU in f32 (loss-numerator precision).
    s = jnp.sum(true_oh * y_log, axis=0, keepdims=True)
    return jnp.concatenate([pcnt, rcnt, right, s], axis=0)           # (4, C)


def _epilogue_math(acc, w_prev, momentum, alpha, gamma):
    """O(C) epilogue. acc: (4, C) f32, w_prev: (1, C) f32. Exact division."""
    pcnt, rcnt, right, s = acc[0:1], acc[1:2], acc[2:3], acc[3:4]
    # Guards only matter when a class is absent from y_pred / y_true -- a
    # regime where the PyTorch reference itself errors on unique() shapes.
    p = right / jnp.maximum(pcnt, 1.0)
    r = right / jnp.maximum(rcnt, 1.0)
    denom = jnp.maximum(alpha * p + (1.0 - alpha) * r, jnp.float32(1e-30))
    focal = 1.0 - (p * r) / denom
    if gamma != 1.0:
        focal = focal ** gamma
    weight = momentum * w_prev + (1.0 - momentum) * focal            # (1, C)
    num = jnp.sum(weight * s, keepdims=True)                         # (1, 1)
    den = jnp.sum(weight * rcnt, keepdims=True)                      # (1, 1)
    # NOTE: den == 0 (all-zero EMA weight & focal) gives NaN like the reference.
    return -(num / den), weight


# --------------------------------------------------------------------------
# Kernels
# --------------------------------------------------------------------------
def _afl_fused_kernel(y_ref, yt_ref, w_ref, loss_ref, wout_ref, acc_scr, *,
                      n_total, tile_n, need_mask, momentum, alpha, gamma):
    """Single-split path: scan + fused epilogue on the last grid step."""
    t = pl.program_id(0)

    @pl.when(t == 0)
    def _init():
        acc_scr[...] = jnp.zeros_like(acc_scr)

    valid = None
    if need_mask:
        rows = t * tile_n + jax.lax.broadcasted_iota(jnp.int32, (tile_n, 1), 0)
        valid = rows < n_total

    acc_scr[...] += _tile_partials(y_ref[...], yt_ref[...], valid)

    @pl.when(t == pl.num_programs(0) - 1)
    def _finalize():
        loss, weight = _epilogue_math(acc_scr[...],
                                      w_ref[...].astype(jnp.float32),
                                      momentum, alpha, gamma)
        loss_ref[...] = loss
        wout_ref[...] = weight


def _afl_scan_kernel(y_ref, yt_ref, part_ref, acc_scr, *, n_total, tile_n,
                     tiles_per_split, need_mask):
    """Multi-split path: per-core scan, emits one (4, C) partial per split."""
    t = pl.program_id(1)

    @pl.when(t == 0)
    def _init():
        acc_scr[...] = jnp.zeros_like(acc_scr)

    valid = None
    if need_mask:
        row0 = (pl.program_id(0) * tiles_per_split + t) * tile_n
        rows = row0 + jax.lax.broadcasted_iota(jnp.int32, (tile_n, 1), 0)
        valid = rows < n_total

    acc_scr[...] += _tile_partials(y_ref[...], yt_ref[...], valid)

    @pl.when(t == pl.num_programs(1) - 1)
    def _flush():
        part_ref[...] = acc_scr[...][None, :, :]


def _afl_epilogue_kernel(part_ref, w_ref, loss_ref, wout_ref, *,
                         momentum, alpha, gamma):
    """Combine per-core partials + EMA weight update + loss (O(C))."""
    acc = jnp.sum(part_ref[...], axis=0)                             # (4, C)
    loss, weight = _epilogue_math(acc, w_ref[...].astype(jnp.float32),
                                  momentum, alpha, gamma)
    loss_ref[...] = loss
    wout_ref[...] = weight


# --------------------------------------------------------------------------
# Wrapper
# --------------------------------------------------------------------------
def adaptive_focal_loss(y, y_true, weight_prev, momentum=0.9, alpha=0.5,
                        gamma=1.0, tile_n=None, n_split=None):
    """y: (N, C) float logits (f32 or bf16); y_true: (N,) int labels;
    weight_prev: (C,) f32 EMA state.  Returns (loss scalar, new weight (C,))."""
    N, C = y.shape
    vmem_limit, tile_budget, n_cores = _tpu_budgets()

    if tile_n is None:
        tile_n = _pick_tile_n(N, C, jnp.dtype(y.dtype).itemsize, tile_budget)
    tile_n = max(8, min(_round_up(int(tile_n), 8), _round_up(N, 8)))
    num_tiles = pl.cdiv(N, tile_n)

    if n_split is None:
        # v7x / v4 megacore: always use both TensorCores when there is more
        # than one tile; odd tile counts get a masked phantom tile instead of
        # idling the second core.
        n_split = 2 if (n_cores >= 2 and num_tiles >= 2) else 1
    n_split = int(n_split)
    tiles_per_split = pl.cdiv(num_tiles, n_split)

    yt2d = y_true.astype(jnp.int32).reshape(N, 1)
    w2d = weight_prev.astype(jnp.float32).reshape(1, C)

    out_shapes = (jax.ShapeDtypeStruct((1, 1), jnp.float32),
                  jax.ShapeDtypeStruct((1, C), jnp.float32))

    if n_split == 1:
        # Single-TC generations (v5e/v6e) / small problems: fused epilogue,
        # one kernel launch, no HBM round-trip of the partials.
        need_mask = (tiles_per_split * tile_n != N)
        fused = functools.partial(
            _afl_fused_kernel, n_total=N, tile_n=tile_n, need_mask=need_mask,
            momentum=float(momentum), alpha=float(alpha), gamma=float(gamma))
        loss, w_new = pl.pallas_call(
            fused,
            out_shape=out_shapes,
            grid_spec=pltpu.PrefetchScalarGridSpec(
                num_scalar_prefetch=0,
                grid=(tiles_per_split,),
                in_specs=[
                    pl.BlockSpec((tile_n, C), lambda t: (t, 0)),
                    pl.BlockSpec((tile_n, 1), lambda t: (t, 0)),
                    pl.BlockSpec((1, C), lambda t: (0, 0)),
                ],
                out_specs=(pl.BlockSpec((1, 1), lambda t: (0, 0)),
                           pl.BlockSpec((1, C), lambda t: (0, 0))),
                scratch_shapes=[pltpu.VMEM((4, C), jnp.float32)]),
            compiler_params=_mosaic_params(("arbitrary",), vmem_limit),
        )(y, yt2d, w2d)
        return loss[0, 0], w_new[0]

    # Multi-TC path (v7x / v4 megacore): leading "parallel" split axis.
    need_mask = (n_split * tiles_per_split * tile_n != N)
    last_block = num_tiles - 1

    def block_map(p, t):
        # Clamp so a phantom tile of a short split re-reads the last real
        # block; its rows are >= N and get fully masked in the kernel.
        return (jnp.minimum(p * tiles_per_split + t, last_block), 0)

    scan = functools.partial(
        _afl_scan_kernel, n_total=N, tile_n=tile_n,
        tiles_per_split=tiles_per_split, need_mask=need_mask)

    partials = pl.pallas_call(
        scan,
        out_shape=jax.ShapeDtypeStruct((n_split, 4, C), jnp.float32),
        grid_spec=pltpu.PrefetchScalarGridSpec(
            num_scalar_prefetch=0,
            grid=(n_split, tiles_per_split),
            in_specs=[
                pl.BlockSpec((tile_n, C), block_map),
                pl.BlockSpec((tile_n, 1), block_map),
            ],
            out_specs=pl.BlockSpec((1, 4, C), lambda p, t: (p, 0, 0)),
            scratch_shapes=[pltpu.VMEM((4, C), jnp.float32)]),
        compiler_params=_mosaic_params(("parallel", "arbitrary"), vmem_limit),
    )(y, yt2d)

    epilogue = functools.partial(
        _afl_epilogue_kernel, momentum=float(momentum), alpha=float(alpha),
        gamma=float(gamma))
    loss, w_new = pl.pallas_call(
        epilogue,
        out_shape=out_shapes,
    )(partials, w2d)
    return loss[0, 0], w_new[0]


# --------------------------------------------------------------------------
# Pure-JAX reference (bincount view of torch.unique counts)
# --------------------------------------------------------------------------
def _reference(y, y_true, weight_prev, momentum=0.9, alpha=0.5, gamma=1.0):
    N, C = y.shape
    y_log = jax.nn.log_softmax(y.astype(jnp.float32), axis=1)
    y_pred = jnp.argmax(y_log, axis=1)
    precision_count = jnp.bincount(y_pred, length=C).astype(jnp.float32)
    recall_count = jnp.bincount(y_true, length=C).astype(jnp.float32)
    right_count = jnp.bincount(
        y_pred, weights=(y_pred == y_true).astype(jnp.float32), length=C)
    p = right_count / precision_count
    r = right_count / recall_count
    focal = 1.0 - p * r / (alpha * p + (1.0 - alpha) * r)
    if gamma != 1.0:
        focal = focal ** gamma
    weight = momentum * weight_prev + (1.0 - momentum) * focal
    label_map = jax.nn.one_hot(y_true, C, dtype=jnp.float32)
    label_weight = label_map * weight
    return -(label_weight * y_log).sum() / label_weight.sum(), weight


if __name__ == "__main__":
    key = jax.random.PRNGKey(0)

    N, C = 32, 4
    # Labels: each class appears 8 times.
    y_true = jnp.array([0, 1, 2, 3] * 8, dtype=jnp.int32)
    # Controlled predictions: 6 correct + 2 wrong per class, so every class
    # appears in y_pred, y_true and among the correct predictions (the regime
    # the PyTorch code implicitly assumes for its broadcasting to be valid).
    idx = jnp.arange(N)
    make_wrong = (idx >= N - 8).astype(jnp.int32)
    pred_target = jnp.where(make_wrong == 1, (y_true + 1) % C, y_true)
    noise = 0.1 * jax.random.normal(key, (N, C), dtype=jnp.float32)
    y = 4.0 * jax.nn.one_hot(pred_target, C, dtype=jnp.float32) + noise
    weight0 = jnp.zeros((C,), dtype=jnp.float32)   # module's initial weight

    ref_loss, ref_w = _reference(y, y_true, weight0)
    y_bf = y.astype(jnp.bfloat16)
    ref_loss_bf, ref_w_bf = _reference(y_bf.astype(jnp.float32), y_true, weight0)

    runs = [
        # (a) auto heuristics (single fused tile here, fused epilogue).
        ("auto", adaptive_focal_loss(y, y_true, weight0), ref_loss, ref_w),
        # (b) fused multi-tile accumulation path (1-D grid of 4 tiles).
        ("fused-4tile", adaptive_focal_loss(y, y_true, weight0, tile_n=8,
                                            n_split=1), ref_loss, ref_w),
        # (c) 2-split megacore path, exact tiling (no masking).
        ("split-even", adaptive_focal_loss(y, y_true, weight0, tile_n=8,
                                           n_split=2), ref_loss, ref_w),
        # (d) 2-split path with odd tile count -> phantom tile + row masking
        #     + partial edge block.
        ("split-odd", adaptive_focal_loss(y, y_true, weight0, tile_n=24,
                                          n_split=2), ref_loss, ref_w),
        # (e) bf16 logits stay bf16 on the wire.
        ("bf16", adaptive_focal_loss(y_bf, y_true, weight0, tile_n=16,
                                     n_split=2), ref_loss_bf, ref_w_bf),
    ]
    jax.block_until_ready([r[1] for r in runs])

    for name, (loss, w_new), rl, rw in runs:
        assert jnp.allclose(loss, rl, rtol=5e-3, atol=1e-4), (name, loss, rl)
        assert jnp.allclose(w_new, rw, rtol=5e-3, atol=1e-4), (name, w_new, rw)

    print("KERNEL_OK")
</pallas_src>

<mosaic_0001>
module attributes {stable_mosaic.version = 11 : i64} {
  func.func @_afl_fused_kernel(%arg0: i32, %arg1: memref<32x4xf32, #tpu.memory_space<vmem>>, %arg2: memref<32x1xi32, #tpu.memory_space<vmem>>, %arg3: memref<1x4xf32, #tpu.memory_space<vmem>>, %arg4: memref<1x1xf32, #tpu.memory_space<vmem>>, %arg5: memref<1x4xf32, #tpu.memory_space<vmem>>, %arg6: memref<4x4xf32, #tpu.memory_space<vmem>>) attributes {dimension_semantics = [#tpu.dimension_semantics<arbitrary>], iteration_bounds = array<i64: 1>, scalar_prefetch = 0 : i64, scratch_operands = 1 : i64, tpu.core_type = #tpu.core_type<tc>, window_params = [{transform_indices = @transform_0, window_bounds = array<i64: 32, 4>}, {transform_indices = @transform_1, window_bounds = array<i64: 32, 1>}, {pipeline_mode = #tpu.pipeline_mode<synchronous>, transform_indices = @transform_2, window_bounds = array<i64: 1, 4>}, {pipeline_mode = #tpu.pipeline_mode<synchronous>, transform_indices = @transform_3, window_bounds = array<i64: 1, 1>}, {pipeline_mode = #tpu.pipeline_mode<synchronous>, transform_indices = @transform_4, window_bounds = array<i64: 1, 4>}]} {
    %c0_i32 = arith.constant 0 : i32
    %0 = arith.cmpi eq, %arg0, %c0_i32 : i32
    %1 = arith.extui %0 : i1 to i32
    %c0_i32_0 = arith.constant 0 : i32
    %2 = arith.cmpi ne, %1, %c0_i32_0 : i32
    scf.if %2 {
      %cst_17 = arith.constant 0.000000e+00 : f32
      %52 = vector.broadcast %cst_17 : f32 to vector<4x4xf32>
      %c0_18 = arith.constant 0 : index
      %c0_19 = arith.constant 0 : index
      %53 = vector.load %arg6[%c0_18, %c0_19] : memref<4x4xf32, #tpu.memory_space<vmem>>, vector<4x4xf32>
      tpu.vector_store %arg6[%c0_18, %c0_19], %52 {strides = array<i32>} : memref<4x4xf32, #tpu.memory_space<vmem>>, vector<4x4xf32>,
    } else {
    }
    %c0 = arith.constant 0 : index
    %c0_1 = arith.constant 0 : index
    %3 = vector.load %arg6[%c0, %c0_1] : memref<4x4xf32, #tpu.memory_space<vmem>>, vector<4x4xf32>
    %c0_2 = arith.constant 0 : index
    %c0_3 = arith.constant 0 : index
    %4 = vector.load %arg1[%c0_2, %c0_3] : memref<32x4xf32, #tpu.memory_space<vmem>>, vector<32x4xf32>
    %c0_4 = arith.constant 0 : index
    %c0_5 = arith.constant 0 : index
    %5 = vector.load %arg2[%c0_4, %c0_5] : memref<32x1xi32, #tpu.memory_space<vmem>>, vector<32x1xi32>
    %6 = tpu.iota {dimensions = array<i32: 1>} : vector<1x4xi32>
    %cst = arith.constant dense<0xFF800000> : vector<32xf32>
    %7 = vector.multi_reduction <maximumf>, %4, %cst [1] : vector<32x4xf32> to vector<32xf32>
    %8 = vector.shape_cast %7 : vector<32xf32> to vector<32x1xf32>
    %9 = vector.broadcast %8 : vector<32x1xf32> to vector<32x4xf32>
    %10 = arith.cmpf oeq, %4, %9 : vector<32x4xf32>
    %c4_i32 = arith.constant 4 : i32
    %11 = vector.shape_cast %6 : vector<1x4xi32> to vector<1x4xi32>
    %12 = vector.broadcast %11 : vector<1x4xi32> to vector<32x4xi32>
    %13 = vector.broadcast %c4_i32 : i32 to vector<32x4xi32>
    %14 = arith.select %10, %12, %13 : vector<32x4xi1>, vector<32x4xi32>
    %cst_6 = arith.constant dense<2147483647> : vector<32xi32>
    %15 = vector.multi_reduction <minsi>, %14, %cst_6 [1] : vector<32x4xi32> to vector<32xi32>
    %16 = vector.shape_cast %15 : vector<32xi32> to vector<32x1xi32>
    %17 = vector.broadcast %8 : vector<32x1xf32> to vector<32x4xf32>
    %18 = arith.subf %4, %17 : vector<32x4xf32>
    %19 = math.exp %18 : vector<32x4xf32>
    %cst_7 = arith.constant dense<0.000000e+00> : vector<32xf32>
    %20 = vector.multi_reduction <add>, %19, %cst_7 [1] : vector<32x4xf32> to vector<32xf32>
    %21 = vector.shape_cast %20 : vector<32xf32> to vector<32x1xf32>
    %22 = math.log %21 : vector<32x1xf32>
    %23 = vector.broadcast %22 : vector<32x1xf32> to vector<32x4xf32>
    %24 = arith.subf %18, %23 : vector<32x4xf32>
    %25 = vector.broadcast %6 : vector<1x4xi32> to vector<32x4xi32>
    %26 = vector.broadcast %16 : vector<32x1xi32> to vector<32x4xi32>
    %27 = arith.cmpi eq, %25, %26 : vector<32x4xi32>
    %28 = arith.extui %27 : vector<32x4xi1> to vector<32x4xi32>
    %29 = arith.sitofp %28 : vector<32x4xi32> to vector<32x4xf32>
    %30 = vector.broadcast %6 : vector<1x4xi32> to vector<32x4xi32>
    %31 = vector.broadcast %5 : vector<32x1xi32> to vector<32x4xi32>
    %32 = arith.cmpi eq, %30, %31 : vector<32x4xi32>
    %33 = arith.extui %32 : vector<32x4xi1> to vector<32x4xi32>
    %34 = arith.sitofp %33 : vector<32x4xi32> to vector<32x4xf32>
    %cst_8 = arith.constant 1.000000e+00 : f32
    %35 = vector.broadcast %cst_8 : f32 to vector<8x32xf32>
    %cst_9 = arith.constant dense<0.000000e+00> : vector<8x4xf32>
    %36 = tpu.matmul %35, %29, %cst_9 {dimension_numbers = #tpu.dot_dimension_numbers<[1], [0], [0], [1], [0, 0, 1, 1], [], []>} : vector<8x32xf32>, vector<32x4xf32>, vector<8x4xf32> -> vector<8x4xf32>
    %37 = vector.extract_strided_slice %36 {offsets = [0, 0], sizes = [1, 4], strides = [1, 1]} : vector<8x4xf32> to vector<1x4xf32>
    %cst_10 = arith.constant dense<0.000000e+00> : vector<8x4xf32>
    %38 = tpu.matmul %35, %34, %cst_10 {dimension_numbers = #tpu.dot_dimension_numbers<[1], [0], [0], [1], [0, 0, 1, 1], [], []>} : vector<8x32xf32>, vector<32x4xf32>, vector<8x4xf32> -> vector<8x4xf32>
    %39 = vector.extract_strided_slice %38 {offsets = [0, 0], sizes = [1, 4], strides = [1, 1]} : vector<8x4xf32> to vector<1x4xf32>
    %40 = arith.mulf %29, %34 : vector<32x4xf32>
    %cst_11 = arith.constant dense<0.000000e+00> : vector<8x4xf32>
    %41 = tpu.matmul %35, %40, %cst_11 {dimension_numbers = #tpu.dot_dimension_numbers<[1], [0], [0], [1], [0, 0, 1, 1], [], []>} : vector<8x32xf32>, vector<32x4xf32>, vector<8x4xf32> -> vector<8x4xf32>
    %42 = vector.extract_strided_slice %41 {offsets = [0, 0], sizes = [1, 4], strides = [1, 1]} : vector<8x4xf32> to vector<1x4xf32>
    %43 = arith.mulf %34, %24 : vector<32x4xf32>
    %cst_12 = arith.constant dense<0.000000e+00> : vector<4xf32>
    %44 = vector.multi_reduction <add>, %43, %cst_12 [0] : vector<32x4xf32> to vector<4xf32>
    %45 = vector.shape_cast %44 : vector<4xf32> to vector<1x4xf32>
    %46 = tpu.concatenate %37, %39, %42, %45 in 0 : vector<1x4xf32>, vector<1x4xf32>, vector<1x4xf32>, vector<1x4xf32> -> vector<4x4xf32>
    %47 = arith.addf %3, %46 : vector<4x4xf32>
    %c0_13 = arith.constant 0 : index
    %c0_14 = arith.constant 0 : index
    %48 = vector.load %arg6[%c0_13, %c0_14] : memref<4x4xf32, #tpu.memory_space<vmem>>, vector<4x4xf32>
    tpu.vector_store %arg6[%c0_13, %c0_14], %47 {strides = array<i32>} : memref<4x4xf32, #tpu.memory_space<vmem>>, vector<4x4xf32>,
    %c0_i32_15 = arith.constant 0 : i32
    %49 = arith.cmpi eq, %arg0, %c0_i32_15 : i32
    %50 = arith.extui %49 : i1 to i32
    %c0_i32_16 = arith.constant 0 : i32
    %51 = arith.cmpi ne, %50, %c0_i32_16 : i32
    scf.if %51 {
      %c0_17 = arith.constant 0 : index
      %c0_18 = arith.constant 0 : index
      %52 = vector.load %arg6[%c0_17, %c0_18] : memref<4x4xf32, #tpu.memory_space<vmem>>, vector<4x4xf32>
      %c0_19 = arith.constant 0 : index
      %c0_20 = arith.constant 0 : index
      %53 = vector.load %arg3[%c0_19, %c0_20] : memref<1x4xf32, #tpu.memory_space<vmem>>, vector<1x4xf32>
      %54 = vector.extract_strided_slice %52 {offsets = [0, 0], sizes = [1, 4], strides = [1, 1]} : vector<4x4xf32> to vector<1x4xf32>
      %55 = vector.extract_strided_slice %52 {offsets = [1, 0], sizes = [1, 4], strides = [1, 1]} : vector<4x4xf32> to vector<1x4xf32>
      %56 = vector.extract_strided_slice %52 {offsets = [2, 0], sizes = [1, 4], strides = [1, 1]} : vector<4x4xf32> to vector<1x4xf32>
      %57 = vector.extract_strided_slice %52 {offsets = [3, 0], sizes = [1, 4], strides = [1, 1]} : vector<4x4xf32> to vector<1x4xf32>
      %cst_21 = arith.constant 1.000000e+00 : f32
      %58 = vector.broadcast %cst_21 : f32 to vector<1x4xf32>
      %59 = arith.maximumf %54, %58 : vector<1x4xf32>
      %60 = arith.divf %56, %59 : vector<1x4xf32>
      %cst_22 = arith.constant 1.000000e+00 : f32
      %61 = vector.broadcast %cst_22 : f32 to vector<1x4xf32>
      %62 = arith.maximumf %55, %61 : vector<1x4xf32>
      %63 = arith.divf %56, %62 : vector<1x4xf32>
      %cst_23 = arith.constant 5.000000e-01 : f32
      %64 = vector.broadcast %cst_23 : f32 to vector<1x4xf32>
      %65 = arith.mulf %64, %60 : vector<1x4xf32>
      %cst_24 = arith.constant 5.000000e-01 : f32
      %66 = vector.broadcast %cst_24 : f32 to vector<1x4xf32>
      %67 = arith.mulf %66, %63 : vector<1x4xf32>
      %68 = arith.addf %65, %67 : vector<1x4xf32>
      %cst_25 = arith.constant 1.000000e-30 : f32
      %69 = vector.broadcast %cst_25 : f32 to vector<1x4xf32>
      %70 = arith.maximumf %68, %69 : vector<1x4xf32>
      %71 = arith.mulf %60, %63 : vector<1x4xf32>
      %72 = arith.divf %71, %70 : vector<1x4xf32>
      %cst_26 = arith.constant 1.000000e+00 : f32
      %73 = vector.broadcast %cst_26 : f32 to vector<1x4xf32>
      %74 = arith.subf %73, %72 : vector<1x4xf32>
      %cst_27 = arith.constant 0.899999976 : f32
      %75 = vector.broadcast %cst_27 : f32 to vector<1x4xf32>
      %76 = arith.mulf %75, %53 : vector<1x4xf32>
      %cst_28 = arith.constant 1.000000e-01 : f32
      %77 = vector.broadcast %cst_28 : f32 to vector<1x4xf32>
      %78 = arith.mulf %77, %74 : vector<1x4xf32>
      %79 = arith.addf %76, %78 : vector<1x4xf32>
      %80 = arith.mulf %79, %57 : vector<1x4xf32>
      %81 = vector.shape_cast %80 : vector<1x4xf32> to vector<1x1x4xf32>
      %cst_29 = arith.constant dense<0.000000e+00> : vector<1xf32>
      %82 = vector.multi_reduction <add>, %81, %cst_29 [1, 2] : vector<1x1x4xf32> to vector<1xf32>
      %83 = vector.shape_cast %82 : vector<1xf32> to vector<1x1x1xf32>
      %84 = vector.extract %83[0, 0, 0] : f32 from vector<1x1x1xf32>
      %85 = vector.broadcast %84 : f32 to vector<1x1xf32>
      %86 = arith.mulf %79, %55 : vector<1x4xf32>
      %87 = vector.shape_cast %86 : vector<1x4xf32> to vector<1x1x4xf32>
      %cst_30 = arith.constant dense<0.000000e+00> : vector<1xf32>
      %88 = vector.multi_reduction <add>, %87, %cst_30 [1, 2] : vector<1x1x4xf32> to vector<1xf32>
      %89 = vector.shape_cast %88 : vector<1xf32> to vector<1x1x1xf32>
      %90 = vector.extract %89[0, 0, 0] : f32 from vector<1x1x1xf32>
      %91 = vector.broadcast %90 : f32 to vector<1x1xf32>
      %92 = arith.divf %85, %91 : vector<1x1xf32>
      %cst_31 = arith.constant 0.000000e+00 : f32
      %93 = vector.broadcast %cst_31 : f32 to vector<1x1xf32>
      %94 = arith.subf %93, %92 : vector<1x1xf32>
      %c0_32 = arith.constant 0 : index
      %c0_33 = arith.constant 0 : index
      %95 = vector.load %arg4[%c0_32, %c0_33] : memref<1x1xf32, #tpu.memory_space<vmem>>, vector<1x1xf32>
      tpu.vector_store %arg4[%c0_32, %c0_33], %94 {strides = array<i32>} : memref<1x1xf32, #tpu.memory_space<vmem>>, vector<1x1xf32>,
      %c0_34 = arith.constant 0 : index
      %c0_35 = arith.constant 0 : index
      %96 = vector.load %arg5[%c0_34, %c0_35] : memref<1x4xf32, #tpu.memory_space<vmem>>, vector<1x4xf32>
      tpu.vector_store %arg5[%c0_34, %c0_35], %79 {strides = array<i32>} : memref<1x4xf32, #tpu.memory_space<vmem>>, vector<1x4xf32>,
    } else {
    }
    return
  }
  func.func @transform_0(%arg0: i32) -> (i32, i32) {
    %c0_i32 = arith.constant 0 : i32
    %c0_i32_0 = arith.constant 0 : i32
    return %arg0, %c0_i32 : i32, i32
  }
  func.func @transform_1(%arg0: i32) -> (i32, i32) {
    %c0_i32 = arith.constant 0 : i32
    %c0_i32_0 = arith.constant 0 : i32
    return %arg0, %c0_i32 : i32, i32
  }
  func.func @transform_2(%arg0: i32) -> (i32, i32) {
    %c0_i32 = arith.constant 0 : i32
    %c0_i32_0 = arith.constant 0 : i32
    %c0_i32_1 = arith.constant 0 : i32
    return %c0_i32, %c0_i32_0 : i32, i32
  }
  func.func @transform_3(%arg0: i32) -> (i32, i32) {
    %c0_i32 = arith.constant 0 : i32
    %c0_i32_0 = arith.constant 0 : i32
    %c0_i32_1 = arith.constant 0 : i32
    return %c0_i32, %c0_i32_0 : i32, i32
  }
  func.func @transform_4(%arg0: i32) -> (i32, i32) {
    %c0_i32 = arith.constant 0 : i32
    %c0_i32_0 = arith.constant 0 : i32
    %c0_i32_1 = arith.constant 0 : i32
    return %c0_i32, %c0_i32_0 : i32, i32
  }
}

</mosaic_0001>

<llo_original>
// kernel: tpu_custom_call.1
$region0: #{tpu_custom_call.1}
  #allocation0 [shape = 'u32[]', space=smem, size = 0x4, offset = 0x4, fixed_abs, tag = 'smem constant byte address 0x4 - core index']
  #allocation1 [shape = 'u32[72,128]{1,0:T(1,128)}', space=vmem, size = 0x9000, scoped, tag = 'internal scratch']
  #allocation2 [shape = 'f32[4,4]{1,0:T(4,128)}', space=vmem, size = 0x800, scoped, tag = 'scratch operand']
  %s0 = inlined_call_operand.vmem [shape: f32[32,4], index: 0, kind: input, shape index: {}]
  %s1 = inlined_call_operand.vmem [shape: s32[32,1], index: 1, kind: input, shape index: {}]
  %s2 = inlined_call_operand.vmem [shape: f32[1,4], index: 2, kind: input, shape index: {}]
  %s3 = inlined_call_operand.hbm [shape: f32[1,1], index: 3, kind: output, shape index: {0}]
  %s4 = inlined_call_operand.hbm [shape: f32[1,4], index: 4, kind: output, shape index: {1}]
  %5 = xla_tuple %s3, %s4
  %s6 = sld [smem:[#allocation0]]
  $region38: #{tpu_custom_call.1} parent=0
    _
  %s8 = ssub.s32 1, %s6
  %s9 = scalar_select 0, %s8, %s6
  $region1: #{tpu_custom_call.1} parent=0
    #allocation3 [shape = 'u8[512]{0}', space=vmem, size = 0x400, scoped, tag = 'output window, operand 0, single buffered']
    #allocation4 [shape = 's32[1]{0}', space=sflag, size = 0x4, scoped, tag = 'scoped memory for tpu_custom_call.1']
    #allocation5 [shape = 'u8[512]{0}', space=vmem, size = 0x400, scoped, tag = 'output window, operand 1, single buffered']
    #allocation6 [shape = 's32[1]{0}', space=sflag, size = 0x4, scoped, tag = 'scoped memory for tpu_custom_call.1']
    %10 = vsyncpa [#allocation4], 0
    %11 = vsyncpa [#allocation6], 0
    // Predicated region
    $region2: #{tpu_custom_call.1} parent=1 // pred_check
      _
    $region3: #{tpu_custom_call.1} parent=1 // pred_check_branch
      %13 = sbr.rel (0) target = $region5
    $region4: #{tpu_custom_call.1} parent=1 // pred_region
      _
    $region5: #{tpu_custom_call.1} parent=1 // pred_fallthru
      _
    // Predicated region
    $region6: #{tpu_custom_call.1} parent=1 // pred_check
      _
    $region7: #{tpu_custom_call.1} parent=1 // pred_check_branch
      %15 = sbr.rel (0) target = $region9
    $region8: #{tpu_custom_call.1} parent=1 // pred_region
      _
    $region9: #{tpu_custom_call.1} parent=1 // pred_fallthru
      _
    // Predicated region
    $region10: #{tpu_custom_call.1} parent=1 // pred_check
      _
    $region11: #{tpu_custom_call.1} parent=1 // pred_check_branch
      %17 = sbr.rel (0) target = $region13
    $region12: #{tpu_custom_call.1} parent=1 // pred_region
      _
    $region13: #{tpu_custom_call.1} parent=1 // pred_fallthru
      _
    %p18 = scmp.eq.s32.totalorder 0, 0
    // Predicated region
    $region14: #{tpu_custom_call.1} parent=1 // pred_check
      %p19 = pneg %p18
    $region15: #{tpu_custom_call.1} parent=1 // pred_check_branch
      %21 = sbr.rel (%p19) target = $region17
    $region16: #{tpu_custom_call.1} parent=1 // pred_region
      %vm22 = vcmask 27648
      %23 = vst.msk [vmem:[#allocation2] sm:$0xf] %vm22, 0.0
    $region17: #{tpu_custom_call.1} parent=1 // pred_fallthru
      _
    %v24 = vld [vmem:[#allocation2] sm:$0xf]
    %v25 = vld [vmem:[%s0] sm:$0xff]
    %v26 = vld [vmem:[%s0 + $0x8] sm:$0xff]
    %v27 = vld [vmem:[%s0 + $0x10] sm:$0xff]
    %v28 = vld [vmem:[%s0 + $0x18] sm:$0xff]
    %v29 = vld [vmem:[%s1] sm:$0xff]
    %v30 = vld [vmem:[%s1 + $0x8] sm:$0xff]
    %v31 = vld [vmem:[%s1 + $0x10] sm:$0xff]
    %v32 = vld [vmem:[%s1 + $0x18] sm:$0xff]
    %v33 = vlaneseq
    %v34 = vand.u32 %v33, 127
    %vm35 = vcmask 31744
    %v36 = vsel %vm35, %v25, -inf
    %37 = vmax.xlane.f32.xlu0 %v36
    %v38 = vpop.xlane.xlu0 %37
    %v39 = vsel %vm35, %v26, -inf
    %40 = vmax.xlane.f32.xlu0 %v39
    %v41 = vpop.xlane.xlu0 %40
    %v42 = vsel %vm35, %v27, -inf
    %43 = vmax.xlane.f32.xlu0 %v42
    %v44 = vpop.xlane.xlu0 %43
    %v45 = vsel %vm35, %v28, -inf
    %46 = vmax.xlane.f32.xlu0 %v45
    %v47 = vpop.xlane.xlu0 %46
    %vm48 = vcmp.eq.f32.partialorder %v25, %v38
    %vm49 = vcmp.eq.f32.partialorder %v26, %v41
    %vm50 = vcmp.eq.f32.partialorder %v27, %v44
    %vm51 = vcmp.eq.f32.partialorder %v28, %v47
    %v52 = vsel %vm48, %v34, 4
    %v53 = vsel %vm49, %v34, 4
    %v54 = vsel %vm50, %v34, 4
    %v55 = vsel %vm51, %v34, 4
    %v56 = vsel %vm35, %v52, 2147483647
    %v57 = vand.u32 %v56, 65535
    %v58 = vshra.s32 %v56, 16
    %v59 = vcvt.s32.f32 %v57
    %v60 = vcvt.s32.f32 %v58
    %61 = vmin.xlane.f32.xlu0 %v60
    %v62 = vpop.xlane.xlu0 %61
    %vm63 = vcmp.eq.f32.partialorder %v60, %v62
    %v64 = vsel %vm63, %v59, inf
    %65 = vmin.xlane.f32.xlu0 %v64
    %v66 = vpop.xlane.xlu0 %65
    %v67 = vcvt.f32.s32 %v66
    %v68 = vcvt.f32.s32 %v62
    %v69 = vshll.u32 %v68, 16
    %v70 = vadd.s32 %v69, %v67
    %v71 = vsel %vm35, %v53, 2147483647
    %v72 = vand.u32 %v71, 65535
    %v73 = vshra.s32 %v71, 16
    %v74 = vcvt.s32.f32 %v72
    %v75 = vcvt.s32.f32 %v73
    %76 = vmin.xlane.f32.xlu0 %v75
    %v77 = vpop.xlane.xlu0 %76
    %vm78 = vcmp.eq.f32.partialorder %v75, %v77
    %v79 = vsel %vm78, %v74, inf
    %80 = vmin.xlane.f32.xlu0 %v79
    %v81 = vpop.xlane.xlu0 %80
    %v82 = vcvt.f32.s32 %v81
    %v83 = vcvt.f32.s32 %v77
    %v84 = vshll.u32 %v83, 16
    %v85 = vadd.s32 %v84, %v82
    %v86 = vsel %vm35, %v54, 2147483647
    %v87 = vand.u32 %v86, 65535
    %v88 = vshra.s32 %v86, 16
    %v89 = vcvt.s32.f32 %v87
    %v90 = vcvt.s32.f32 %v88
    %91 = vmin.xlane.f32.xlu0 %v90
    %v92 = vpop.xlane.xlu0 %91
    %vm93 = vcmp.eq.f32.partialorder %v90, %v92
    %v94 = vsel %vm93, %v89, inf
    %95 = vmin.xlane.f32.xlu0 %v94
    %v96 = vpop.xlane.xlu0 %95
    %v97 = vcvt.f32.s32 %v96
    %v98 = vcvt.f32.s32 %v92
    %v99 = vshll.u32 %v98, 16
    %v100 = vadd.s32 %v99, %v97
    %v101 = vsel %vm35, %v55, 2147483647
    %v102 = vand.u32 %v101, 65535
    %v103 = vshra.s32 %v101, 16
    %v104 = vcvt.s32.f32 %v102
    %v105 = vcvt.s32.f32 %v103
    %106 = vmin.xlane.f32.xlu0 %v105
    %v107 = vpop.xlane.xlu0 %106
    %vm108 = vcmp.eq.f32.partialorder %v105, %v107
    %v109 = vsel %vm108, %v104, inf
    %110 = vmin.xlane.f32.xlu0 %v109
    %v111 = vpop.xlane.xlu0 %110
    %v112 = vcvt.f32.s32 %v111
    %v113 = vcvt.f32.s32 %v107
    %v114 = vshll.u32 %v113, 16
    %v115 = vadd.s32 %v114, %v112
    %v116 = vsub.f32 %v25, %v38
    %v117 = vsub.f32 %v26, %v41
    %v118 = vsub.f32 %v27, %v44
    %v119 = vsub.f32 %v28, %v47
    %v120 = vmul.f32 %v116, 1.442695
    %v121 = vpow.pop %v120
    %v122 = vmul.f32 %v117, 1.442695
    %v123 = vpow.pop %v122
    %v124 = vmul.f32 %v118, 1.442695
    %v125 = vpow.pop %v124
    %v126 = vmul.f32 %v119, 1.442695
    %v127 = vpow.pop %v126
    %v128 = vsel %vm35, %v121, 0.0
    %129 = vadd.xlane.f32.xlu0 %v128
    %v130 = vpop.xlane.xlu0 %129
    %v131 = vsel %vm35, %v123, 0.0
    %132 = vadd.xlane.f32.xlu0 %v131
    %v133 = vpop.xlane.xlu0 %132
    %v134 = vsel %vm35, %v125, 0.0
    %135 = vadd.xlane.f32.xlu0 %v134
    %v136 = vpop.xlane.xlu0 %135
    %v137 = vsel %vm35, %v127, 0.0
    %138 = vadd.xlane.f32.xlu0 %v137
    %v139 = vpop.xlane.xlu0 %138
    %v140 = vlog2.pop %v130
    %v141 = vmul.f32 %v140, 0.6931472
    %v142 = vlog2.pop %v133
    %v143 = vmul.f32 %v142, 0.6931472
    %v144 = vlog2.pop %v136
    %v145 = vmul.f32 %v144, 0.6931472
    %v146 = vlog2.pop %v139
    %v147 = vmul.f32 %v146, 0.6931472
    %v148 = vsub.f32 %v116, %v141
    %v149 = vsub.f32 %v117, %v143
    %v150 = vsub.f32 %v118, %v145
    %v151 = vsub.f32 %v119, %v147
    %vm152 = vcmp.eq.s32.totalorder %v34, %v70
    %vm153 = vcmp.eq.s32.totalorder %v34, %v85
    %vm154 = vcmp.eq.s32.totalorder %v34, %v100
    %vm155 = vcmp.eq.s32.totalorder %v34, %v115
    %v156 = vsel %vm152, 1, 0
    %v157 = vsel %vm153, 1, 0
    %v158 = vsel %vm154, 1, 0
    %v159 = vsel %vm155, 1, 0
    %v160 = vcvt.s32.f32 %v156
    %v161 = vcvt.s32.f32 %v157
    %v162 = vcvt.s32.f32 %v158
    %v163 = vcvt.s32.f32 %v159
    %164 = vset.pattern.permute.xlu0 0
    %165 = vperm.xlu0 %164, %v29
    %v166 = vpop.permute.xlu0 %165
    %167 = vset.pattern.permute.xlu0 0
    %168 = vperm.xlu0 %167, %v30
    %v169 = vpop.permute.xlu0 %168
    %170 = vset.pattern.permute.xlu0 0
    %171 = vperm.xlu0 %170, %v31
    %v172 = vpop.permute.xlu0 %171
    %173 = vset.pattern.permute.xlu0 0
    %174 = vperm.xlu0 %173, %v32
    %v175 = vpop.permute.xlu0 %174
    %vm176 = vcmp.eq.s32.totalorder %v34, %v166
    %vm177 = vcmp.eq.s32.totalorder %v34, %v169
    %vm178 = vcmp.eq.s32.totalorder %v34, %v172
    %vm179 = vcmp.eq.s32.totalorder %v34, %v175
    %v180 = vsel %vm176, 1, 0
    %v181 = vsel %vm177, 1, 0
    %v182 = vsel %vm178, 1, 0
    %v183 = vsel %vm179, 1, 0
    %v184 = vcvt.s32.f32 %v180
    %v185 = vcvt.s32.f32 %v181
    %v186 = vcvt.s32.f32 %v182
    %v187 = vcvt.s32.f32 %v183
    %vm188 = vcmask 261120
    %v190 = vsel %vm188, 1.0, 0
    %192 = vmatpush.msra.mxu0 0.0
    %193 = vmatpush.msra.mxu0 0.0
    %194 = vmatpush.msra.mxu0 0.0
    %195 = vmatpush.msra.mxu0 0.0
    %196 = vmatpush.msra.mxu0 0.0
    %197 = vmatpush.msra.mxu0 0.0
    %198 = vmatpush.msra.mxu0 0.0
    %199 = vmatpush.msra.mxu0 0.0
    %200 = vmatpush.msra.mxu0 0.0
    %201 = vmatpush.msra.mxu0 0.0
    %202 = vmatpush.msra.mxu0 0.0
    %203 = vmatpush.msra.mxu0 0.0
    %204 = vmatpush.msra.mxu0 %v163
    %205 = vmatpush.msra.mxu0 %v162
    %206 = vmatpush.msra.mxu0 %v161
    %207 = vmatpush.msra.mxu0 %v160
    %208 = vmatmul.f32.gmra.mxu0 %v190
    %v209 = vpop.f32.mrf.mxu0
    %v210 = vadd.f32 0.0, %v209
    %211 = vdwg.mxu0
    %212 = vmatpush.msra.mxu0 0.0
    %213 = vmatpush.msra.mxu0 0.0
    %214 = vmatpush.msra.mxu0 0.0
    %215 = vmatpush.msra.mxu0 0.0
    %216 = vmatpush.msra.mxu0 0.0
    %217 = vmatpush.msra.mxu0 0.0
    %218 = vmatpush.msra.mxu0 0.0
    %219 = vmatpush.msra.mxu0 0.0
    %220 = vmatpush.msra.mxu0 0.0
    %221 = vmatpush.msra.mxu0 0.0
    %222 = vmatpush.msra.mxu0 0.0
    %223 = vmatpush.msra.mxu0 0.0
    %224 = vmatpush.msra.mxu0 %v187
    %225 = vmatpush.msra.mxu0 %v186
    %226 = vmatpush.msra.mxu0 %v185
    %227 = vmatpush.msra.mxu0 %v184
    %228 = vmatmul.f32.gmra.mxu0 %v190
    %v229 = vpop.f32.mrf.mxu0
    %v230 = vadd.f32 0.0, %v229
    %231 = vdwg.mxu0
    %v232 = vmul.f32 %v160, %v184
    %v233 = vmul.f32 %v161, %v185
    %v234 = vmul.f32 %v162, %v186
    %v235 = vmul.f32 %v163, %v187
    %236 = vmatpush.msra.mxu0 0.0
    %237 = vmatpush.msra.mxu0 0.0
    %238 = vmatpush.msra.mxu0 0.0
    %239 = vmatpush.msra.mxu0 0.0
    %240 = vmatpush.msra.mxu0 0.0
    %241 = vmatpush.msra.mxu0 0.0
    %242 = vmatpush.msra.mxu0 0.0
    %243 = vmatpush.msra.mxu0 0.0
    %244 = vmatpush.msra.mxu0 0.0
    %245 = vmatpush.msra.mxu0 0.0
    %246 = vmatpush.msra.mxu0 0.0
    %247 = vmatpush.msra.mxu0 0.0
    %248 = vmatpush.msra.mxu0 %v235
    %249 = vmatpush.msra.mxu0 %v234
    %250 = vmatpush.msra.mxu0 %v233
    %251 = vmatpush.msra.mxu0 %v232
    %252 = vmatmul.f32.gmra.mxu0 %v190
    %v253 = vpop.f32.mrf.mxu0
    %v254 = vadd.f32 0.0, %v253
    %255 = vdwg.mxu0
    %v256 = vmul.f32 %v184, %v148
    %v257 = vmul.f32 %v185, %v149
    %v258 = vmul.f32 %v186, %v150
    %v259 = vmul.f32 %v187, %v151
    %v260 = vsel %vm35, %v256, 0.0
    %v261 = vsel %vm35, %v257, 0.0
    %v262 = vadd.f32 %v260, %v261
    %v263 = vsel %vm35, %v258, 0.0
    %v264 = vadd.f32 %v262, %v263
    %v265 = vsel %vm35, %v259, 0.0
    %v266 = vadd.f32 %v264, %v265
    %v267 = vrot.slane %v266, 4
    %v268 = vadd.f32 %v266, %v267
    %v269 = vrot.slane %v268, 2
    %v270 = vadd.f32 %v268, %v269
    %v271 = vrot.slane %v270, 1
    %v272 = vadd.f32 %v270, %v271
    %v274 = vrot.slane %v230, 7
    %v277 = vrot.slane %v254, 6
    %vm279 = vcmask 1040384
    %v280 = vsel %vm279, %v210, %v274
    %vm281 = vcmask 1041408
    %v282 = vsel %vm281, %v280, %v277
    %vm283 = vcmask 1042432
    %v284 = vsel %vm283, %v282, %v272
    %v285 = vadd.f32 %v24, %v284
    %vm286 = vcmask 27648
    %287 = vst.msk [vmem:[#allocation2] sm:$0xf] %vm286, %v285
    // Predicated region
    $region18: #{tpu_custom_call.1} parent=1 // pred_check
      %p288 = pneg %p18
    $region19: #{tpu_custom_call.1} parent=1 // pred_check_branch
      %290 = sbr.rel (%p288) target = $region21
    $region20: #{tpu_custom_call.1} parent=1 // pred_region
      %v291 = vld [vmem:[#allocation2] sm:$0xf]
      %v292 = vld [vmem:[%s2] sm:$0x1]
      %v293 = vmax.f32 %v291, 1.0
      %v295 = vrot.slane %v293, 6
      %v297 = vrcp.pop %v295
      %v298 = vmul.f32 %v295, %v297
      %v299 = vsub.f32 1.0, %v298
      %v300 = vmul.f32 %v297, %v299
      %v301 = vadd.f32 %v297, %v300
      %vm302 = vweird.f32 %v295
      %vm303 = vweird.f32 %v297
      %vm304 = vmor %vm302, %vm303
      %v305 = vsel %vm304, %v297, %v301
      %v306 = vand.u32 2147483647, %v295
      %vm307 = vcmp.eq.f32.partialorder %v306, 8.507059e+37
      %v308 = vand.u32 %v295, 2147483648
      %v309 = vor.u32 1.1754944e-38, %v308
      %v310 = vsel %vm307, %v309, %v305
      %v311 = vmul.f32 %v291, %v310
      %v312 = vrot.slane %v293, 7
      %v314 = vrcp.pop %v312
      %v315 = vmul.f32 %v312, %v314
      %v316 = vsub.f32 1.0, %v315
      %v317 = vmul.f32 %v314, %v316
      %v318 = vadd.f32 %v314, %v317
      %vm319 = vweird.f32 %v312
      %vm320 = vweird.f32 %v314
      %vm321 = vmor %vm319, %vm320
      %v322 = vsel %vm321, %v314, %v318
      %v323 = vand.u32 2147483647, %v312
      %vm324 = vcmp.eq.f32.partialorder %v323, 8.507059e+37
      %v325 = vand.u32 %v312, 2147483648
      %v326 = vor.u32 1.1754944e-38, %v325
      %v327 = vsel %vm324, %v326, %v322
      %v328 = vmul.f32 %v291, %v327
      %v329 = vmul.f32 %v311, 0.5
      %v330 = vmul.f32 %v328, 0.5
      %v331 = vadd.f32 %v329, %v330
      %v332 = vmax.f32 %v331, 1e-30
      %v333 = vmul.f32 %v311, %v328
      %v334 = vrcp.pop %v332
      %v335 = vmul.f32 %v332, %v334
      %v336 = vsub.f32 1.0, %v335
      %v337 = vmul.f32 %v334, %v336
      %v338 = vadd.f32 %v334, %v337
      %vm339 = vweird.f32 %v332
      %vm340 = vweird.f32 %v334
      %vm341 = vmor %vm339, %vm340
      %v342 = vsel %vm341, %v334, %v338
      %v343 = vand.u32 2147483647, %v332
      %vm344 = vcmp.eq.f32.partialorder %v343, 8.507059e+37
      %v345 = vand.u32 %v332, 2147483648
      %v346 = vor.u32 1.1754944e-38, %v345
      %v347 = vsel %vm344, %v346, %v342
      %v348 = vmul.f32 %v333, %v347
      %v349 = vsub.f32 1.0, %v348
      %v350 = vmul.f32 %v292, 0.9
      %v351 = vmul.f32 %v349, 0.1
      %353 = vst [vmem:[#allocation1] sm:$0xff] %v351
      %s354 = scalar_lea.vmem [#allocation1], 2
      %v355 = vld [vmem:[%s354] ss:$9 sm:$0xff]
      %v357 = vadd.f32 %v350, %v355
      %359 = vst [vmem:[#allocation1] sm:$0xff] %v291
      %s360 = scalar_lea.vmem [#allocation1], 3
      %v361 = vld [vmem:[%s360] ss:$9 sm:$0xff]
      %v363 = vmul.f32 %v357, %v361
      %vm364 = vcmask 24576
      %v365 = vsel %vm364, %v363, 0.0
      %366 = vadd.xlane.f32.xlu0 %v365
      %v367 = vpop.xlane.xlu0 %366
      %v368 = vrot.slane %v367, 4
      %v369 = vadd.f32 %v367, %v368
      %v370 = vrot.slane %v369, 2
      %v371 = vadd.f32 %v369, %v370
      %v372 = vrot.slane %v371, 1
      %v373 = vadd.f32 %v371, %v372
      %s374 = vtos %v373
      %v375 = vstv %s374
      %376 = vst [vmem:[#allocation1] sm:$0xff] %v291
      %s377 = scalar_lea.vmem [#allocation1], 1
      %v378 = vld [vmem:[%s377] ss:$9 sm:$0xff]
      %v380 = vmul.f32 %v357, %v378
      %v381 = vsel %vm364, %v380, 0.0
      %382 = vadd.xlane.f32.xlu0 %v381
      %v383 = vpop.xlane.xlu0 %382
      %v384 = vrot.slane %v383, 4
      %v385 = vadd.f32 %v383, %v384
      %v386 = vrot.slane %v385, 2
      %v387 = vadd.f32 %v385, %v386
      %v388 = vrot.slane %v387, 1
      %v389 = vadd.f32 %v387, %v388
      %s390 = vtos %v389
      %v391 = vstv %s390
      %v392 = vrcp.pop %v391
      %v393 = vmul.f32 %v391, %v392
      %v394 = vsub.f32 1.0, %v393
      %v395 = vmul.f32 %v392, %v394
      %v396 = vadd.f32 %v392, %v395
      %vm397 = vweird.f32 %v391
      %vm398 = vweird.f32 %v392
      %vm399 = vmor %vm397, %vm398
      %v400 = vsel %vm399, %v392, %v396
      %v401 = vand.u32 2147483647, %v391
      %vm402 = vcmp.eq.f32.partialorder %v401, 8.507059e+37
      %v403 = vand.u32 %v391, 2147483648
      %v404 = vor.u32 1.1754944e-38, %v403
      %v405 = vsel %vm402, %v404, %v400
      %v406 = vmul.f32 %v375, %v405
      %v407 = vsub.f32 0.0, %v406
      %vm408 = vcmask 0
      %409 = vst.msk [vmem:[#allocation3] sm:$0x1] %vm408, %v407
      %410 = vst.msk [vmem:[#allocation5] sm:$0x1] %vm364, %v357
    $region21: #{tpu_custom_call.1} parent=1 // pred_fallthru
      _
    // Predicated region
    $region22: #{tpu_custom_call.1} parent=1 // pred_check
      _
    $region23: #{tpu_custom_call.1} parent=1 // pred_check_branch
      %412 = sbr.rel (0) target = $region25
    $region24: #{tpu_custom_call.1} parent=1 // pred_region
      %414 = vsyncadd [#allocation4], 0
      %s416 = sshll.u32 [#allocation3], 4
      %s417 = int_to_ptr.vmem [resolvable:$true] %s416
      %s418 = sshll.u32 %s3, 4
      %s419 = int_to_ptr.hbm [resolvable:$true] %s418
      %421 = dma.vmem_to_hbm [thread:$0]  %s417, 16, %s419, [#allocation4]
    $region25: #{tpu_custom_call.1} parent=1 // pred_fallthru
      _
    // Predicated region
    $region26: #{tpu_custom_call.1} parent=1 // pred_check
      _
    $region27: #{tpu_custom_call.1} parent=1 // pred_check_branch
      %423 = sbr.rel (0) target = $region29
    $region28: #{tpu_custom_call.1} parent=1 // pred_region
      %425 = vsyncadd [#allocation6], 0
      %s427 = sshll.u32 [#allocation5], 4
      %s428 = int_to_ptr.vmem [resolvable:$true] %s427
      %s429 = sshll.u32 %s4, 4
      %s430 = int_to_ptr.hbm [resolvable:$true] %s429
      %432 = dma.vmem_to_hbm [thread:$0]  %s428, 16, %s430, [#allocation6]
    $region29: #{tpu_custom_call.1} parent=1 // pred_fallthru
      _
    // Predicated region
    $region30: #{tpu_custom_call.1} parent=1 // pred_check
      _
    $region31: #{tpu_custom_call.1} parent=1 // pred_check_branch
      %434 = sbr.rel (0) target = $region33
    $region32: #{tpu_custom_call.1} parent=1 // pred_region
      %436 = dma.done [#allocation4], 16
    $region33: #{tpu_custom_call.1} parent=1 // pred_fallthru
      _
    // Predicated region
    $region34: #{tpu_custom_call.1} parent=1 // pred_check
      _
    $region35: #{tpu_custom_call.1} parent=1 // pred_check_branch
      %438 = sbr.rel (0) target = $region37
    $region36: #{tpu_custom_call.1} parent=1 // pred_region
      %440 = dma.done [#allocation6], 16
    $region37: #{tpu_custom_call.1} parent=1 // pred_fallthru
      _
    %441 = vsyncpa [#allocation4], 1
    %442 = vsyncpa [#allocation6], 1

</llo_original>
